<compile_context>
chip_gen: v7x
topology: tpu7x:2x2x1
jax: 0.10.0
libtpu: 0.0.40
codegen_flags: <defaults>
</compile_context>

<pallas_src>
from collections import OrderedDict

import jax
import jax.numpy as jnp
from jax.experimental import pallas as pl
from jax.experimental.pallas import tpu as pltpu

MAX_NB = 8
HP = 128   # lane-padded hidden size
LP = 128   # lane-padded latent size
VP = 128   # lane-padded vocab size


# ------------------------------------------------------------------ synthetic trees
class Node:
    def __init__(self, idx, wid):
        self.idx = idx
        self.wid = wid
        self.neighbors = []


class Tree:
    def __init__(self, nodes):
        self.nodes = nodes


def dfs(stack, x, fa):
    for y in x.neighbors:
        if y.idx == fa.idx:
            continue
        stack.append((x, y, 1))
        dfs(stack, y, x)
        stack.append((y, x, 0))


# ------------------------------------------------------------------ Pallas kernels
def gru_kernel(x_ref, hnei_ref, onei_ref,
               wx3_ref, bx3_ref, wzh_ref, ur_ref, whh_ref,
               newh_ref, curo_ref):
    """Tree-GRU cell with fused x-side weights and batched neighbor matmul.

    x: (Bp, HP), hnei/onei: (Bp, MAX_NB, HP) -> new_h: (Bp, HP), cur_o: (Bp, HP).
    """
    bp = x_ref.shape[0]
    x = x_ref[...]                                    # (Bp, HP)
    hnei3 = hnei_ref[...]                             # (Bp, MAX_NB, HP)
    hnei2 = hnei3.reshape(bp * MAX_NB, HP)            # tile-preserving reshape

    sum_h = jnp.sum(hnei3, axis=1)                    # (Bp, HP)
    curo_ref[...] = jnp.sum(onei_ref[...], axis=1)    # fused cur_o output

    # one fused x-side matmul: [W_z|x, W_r, W_h|x] -> (Bp, 3*HP)
    x3 = jnp.dot(x, wx3_ref[...], preferred_element_type=jnp.float32) + bx3_ref[...]
    zx = x3[:, 0 * HP:1 * HP]
    rx = x3[:, 1 * HP:2 * HP]
    hx = x3[:, 2 * HP:3 * HP]

    z = jax.nn.sigmoid(
        zx + jnp.dot(sum_h, wzh_ref[...], preferred_element_type=jnp.float32))

    # one batched (Bp*MAX_NB, HP) matmul for the r-gate instead of 8 micro-dots
    r_pre = jnp.dot(hnei2, ur_ref[...], preferred_element_type=jnp.float32)
    r = jax.nn.sigmoid(r_pre.reshape(bp, MAX_NB, HP) + rx[:, None, :])
    gated = jnp.sum(r * hnei3, axis=1)                # (Bp, HP)

    pre_h = jnp.tanh(
        hx + jnp.dot(gated, whh_ref[...], preferred_element_type=jnp.float32))
    newh_ref[...] = (1.0 - z) * sum_h + z * pre_h


def mlp2_kernel(x_ref, w1_ref, b1_ref, w2_ref, b2_ref, out_ref):
    """out = (ReLU(x @ W1 + b1)) @ W2 + b2 — used for both pred and stop heads."""
    hid = jnp.maximum(
        jnp.dot(x_ref[...], w1_ref[...], preferred_element_type=jnp.float32)
        + b1_ref[...], 0.0)
    out_ref[...] = (jnp.dot(hid, w2_ref[...], preferred_element_type=jnp.float32)
                    + b2_ref[...])


# ------------------------------------------------------------------ kernel wrappers
_VMEM = pl.BlockSpec(memory_space=pltpu.MemorySpace.VMEM)


@jax.jit
def gru_step(x, h_nei, o_nei, wx3, bx3, wzh, ur, whh):
    bp = x.shape[0]
    return pl.pallas_call(
        gru_kernel,
        out_shape=(jax.ShapeDtypeStruct((bp, HP), jnp.float32),
                   jax.ShapeDtypeStruct((bp, HP), jnp.float32)),
        in_specs=[_VMEM] * 8,
        out_specs=(_VMEM, _VMEM),
    )(x, h_nei, o_nei, wx3, bx3, wzh, ur, whh)


@jax.jit
def mlp2(x, w1, b1, w2, b2):
    n = x.shape[0]
    vout = w2.shape[1]
    return pl.pallas_call(
        mlp2_kernel,
        out_shape=jax.ShapeDtypeStruct((n, vout), jnp.float32),
        in_specs=[_VMEM] * 5,
        out_specs=_VMEM,
    )(x, w1, b1, w2, b2)


# ------------------------------------------------------------------ helpers
def _round_up(n, m):
    return ((n + m - 1) // m) * m


def _pad_rows(a, n_rows):
    pad = n_rows - a.shape[0]
    if pad == 0:
        return a
    return jnp.concatenate([a, jnp.zeros((pad,) + a.shape[1:], a.dtype)], axis=0)


# ------------------------------------------------------------------ forward pass
def jtnn_decoder_forward(mol_batch, mol_vec, params, hidden_size, latent_size,
                         vocab_size):
    H, L, V = hidden_size, latent_size, vocab_size
    batch_size = len(mol_batch)
    emb = params['embedding']                                   # (V, HP)
    mol_vec_p = jnp.pad(mol_vec, ((0, 0), (0, LP - L)))         # (B, LP)
    padding = jnp.zeros((HP,), jnp.float32)

    pred_hiddens, pred_mol_vecs, pred_targets = [], [], []
    stop_x_parts, stop_o_parts, stop_mv_parts, stop_targets = [], [], [], []

    traces = []
    super_root = Node(-1, -1)
    for tree in mol_batch:
        s = []
        dfs(s, tree.nodes[0], super_root)
        traces.append(s)
        for node in tree.nodes:
            node.neighbors = []

    pred_hiddens.append(jnp.zeros((batch_size, HP), jnp.float32))
    pred_targets.extend([tree.nodes[0].wid for tree in mol_batch])
    pred_mol_vecs.append(mol_vec_p)

    max_iter = max(len(tr) for tr in traces)
    step_counts = [sum(1 for tr in traces if t < len(tr)) for t in range(max_iter)]
    # fixed sublane-aligned GRU batch bucket -> gru_step compiles exactly once
    bp = max(8, _round_up(max(step_counts), 8)) if step_counts else 8
    h = OrderedDict()

    for t in range(max_iter):
        prop_list, batch_list = [], []
        for i, plist in enumerate(traces):
            if t < len(plist):
                prop_list.append(plist[t])
                batch_list.append(i)
        bt = len(prop_list)

        cur_x, cur_h_nei, cur_o_nei = [], [], []
        for node_x, real_y, _ in prop_list:
            nei = [h[(ny.idx, node_x.idx)] for ny in node_x.neighbors
                   if ny.idx != real_y.idx]
            cur_h_nei.extend(nei + [padding] * (MAX_NB - len(nei)))
            nei = [h[(ny.idx, node_x.idx)] for ny in node_x.neighbors]
            cur_o_nei.extend(nei + [padding] * (MAX_NB - len(nei)))
            cur_x.append(node_x.wid)

        cur_x_emb = emb[jnp.asarray(cur_x, jnp.int32)]          # (bt, HP)
        h_nei = _pad_rows(jnp.stack(cur_h_nei, 0),
                          bp * MAX_NB).reshape(bp, MAX_NB, HP)
        o_nei = _pad_rows(jnp.stack(cur_o_nei, 0),
                          bp * MAX_NB).reshape(bp, MAX_NB, HP)
        x_pad = _pad_rows(cur_x_emb, bp)

        new_h_p, cur_o_p = gru_step(x_pad, h_nei, o_nei,
                                    params['W_x3'], params['b_x3'],
                                    params['Wz_h'], params['U_r'], params['Wh_h'])
        new_h = new_h_p[:bt]
        cur_o = cur_o_p[:bt]

        pred_target, pred_list, stop_target = [], [], []
        for i, m in enumerate(prop_list):
            node_x, node_y, direction = m
            h[(node_x.idx, node_y.idx)] = new_h[i]
            node_y.neighbors.append(node_x)
            if direction == 1:
                pred_target.append(node_y.wid)
                pred_list.append(i)
            stop_target.append(direction)

        stop_x_parts.append(cur_x_emb)
        stop_o_parts.append(cur_o)
        stop_mv_parts.append(mol_vec_p[jnp.asarray(batch_list, jnp.int32)])
        stop_targets.extend(stop_target)

        if pred_list:
            bl = [batch_list[i] for i in pred_list]
            pred_mol_vecs.append(mol_vec_p[jnp.asarray(bl, jnp.int32)])
            pred_hiddens.append(new_h[jnp.asarray(pred_list, jnp.int32)])
            pred_targets.extend(pred_target)

    # final stop prediction for the roots
    cur_x, cur_o_nei = [], []
    for tree in mol_batch:
        node_x = tree.nodes[0]
        cur_x.append(node_x.wid)
        nei = [h[(ny.idx, node_x.idx)] for ny in node_x.neighbors]
        cur_o_nei.extend(nei + [padding] * (MAX_NB - len(nei)))
    cur_x_emb = emb[jnp.asarray(cur_x, jnp.int32)]
    cur_o = jnp.sum(jnp.stack(cur_o_nei, 0).reshape(-1, MAX_NB, HP), axis=1)
    stop_x_parts.append(cur_x_emb)
    stop_o_parts.append(cur_o)
    stop_mv_parts.append(mol_vec_p)
    stop_targets.extend([0] * batch_size)

    # ---- prediction head (fused Pallas MLP) + cross entropy (sum) ----
    pred_in = jnp.concatenate([jnp.concatenate(pred_hiddens, 0),
                               jnp.concatenate(pred_mol_vecs, 0)], axis=1)  # (Np, HP+LP)
    n_pred = pred_in.shape[0]
    pred_scores = mlp2(_pad_rows(pred_in, _round_up(n_pred, 8)),
                       params['W_pred'], params['b_W'],
                       params['W_o'], params['b_Wo'])[:n_pred, :V]
    pred_targets = jnp.asarray(pred_targets, jnp.int32)
    logp = jax.nn.log_softmax(pred_scores, axis=-1)
    pred_loss = -jnp.sum(
        jnp.take_along_axis(logp, pred_targets[:, None], axis=1)) / batch_size
    preds = jnp.argmax(pred_scores, axis=1)
    pred_acc = jnp.sum((preds == pred_targets).astype(jnp.float32)) / pred_targets.size

    # ---- stop head (fused Pallas MLP) + BCE-with-logits (sum) ----
    stop_in = jnp.concatenate([jnp.concatenate(stop_x_parts, 0),
                               jnp.concatenate(stop_o_parts, 0),
                               jnp.concatenate(stop_mv_parts, 0)], axis=1)  # (Ns, 2HP+LP)
    n_stop = stop_in.shape[0]
    stop_scores = mlp2(_pad_rows(stop_in, _round_up(n_stop, 8)),
                       params['U_fused'], params['b_U'],
                       params['U_s'], params['b_Us'])[:n_stop, 0]           # (Ns,)
    stop_targets = jnp.asarray(stop_targets, jnp.float32)
    bce = (jnp.maximum(stop_scores, 0.0) - stop_scores * stop_targets
           + jnp.log1p(jnp.exp(-jnp.abs(stop_scores))))
    stop_loss = jnp.sum(bce) / batch_size
    stops = (stop_scores >= 0.5).astype(jnp.float32)
    stop_acc = jnp.sum((stops == stop_targets).astype(jnp.float32)) / stop_targets.size

    return pred_loss, stop_loss, float(pred_acc), float(stop_acc)


# ------------------------------------------------------------------ params
def init_params(key, vocab_size, hidden_size, latent_size):
    """True-size random weights, zero-padded / fused into kernel-ready tensors."""
    H, L, V = hidden_size, latent_size, vocab_size
    ks = list(jax.random.split(key, 24))

    def w(k, shape, scale=0.1):
        return jax.random.normal(k, shape, jnp.float32) * scale

    # true-size weights (pre-transposed to (in_features, out_features))
    emb = w(ks[0], (V, H))
    Wz_x = w(ks[1], (H, H)); Wz_h = w(ks[2], (H, H)); b_z = w(ks[3], (1, H))
    W_r = w(ks[4], (H, H)); b_r = w(ks[5], (1, H)); U_r = w(ks[6], (H, H))
    Wh_x = w(ks[7], (H, H)); Wh_h = w(ks[8], (H, H)); b_h = w(ks[9], (1, H))
    W_hid = w(ks[10], (H, H)); W_lat = w(ks[11], (L, H)); b_W = w(ks[12], (1, H))
    W_o = w(ks[13], (H, V)); b_Wo = w(ks[14], (1, V))
    U_x = w(ks[15], (H, H)); U_o = w(ks[16], (H, H)); U_lat = w(ks[17], (L, H))
    b_U = w(ks[18], (1, H))
    U_s = w(ks[19], (H, 1)); b_Us = w(ks[20], (1, 1))

    def pad2(a, rows, cols):
        return jnp.pad(a, ((0, rows - a.shape[0]), (0, cols - a.shape[1])))

    return {
        'embedding': pad2(emb, V, HP),                                      # (V, HP)
        # GRU: fused x-side weight [W_z|x, W_r, W_h|x] and biases
        'W_x3': jnp.concatenate([pad2(Wz_x, HP, HP), pad2(W_r, HP, HP),
                                 pad2(Wh_x, HP, HP)], axis=1),              # (HP, 3HP)
        'b_x3': jnp.concatenate([pad2(b_z, 1, HP), pad2(b_r, 1, HP),
                                 pad2(b_h, 1, HP)], axis=1),                # (1, 3HP)
        'Wz_h': pad2(Wz_h, HP, HP),
        'U_r': pad2(U_r, HP, HP),
        'Wh_h': pad2(Wh_h, HP, HP),
        # pred head: W fused over [hidden, mol_vec], W_o padded to lane-dense V
        'W_pred': jnp.concatenate([pad2(W_hid, HP, HP),
                                   pad2(W_lat, LP, HP)], axis=0),           # (HP+LP, HP)
        'b_W': pad2(b_W, 1, HP),
        'W_o': pad2(W_o, HP, VP), 'b_Wo': pad2(b_Wo, 1, VP),
        # stop head: U fused over [cur_x, cur_o, mol_vec], U_s padded to 128 lanes
        'U_fused': jnp.concatenate([pad2(U_x, HP, HP), pad2(U_o, HP, HP),
                                    pad2(U_lat, LP, HP)], axis=0),          # (2HP+LP, HP)
        'b_U': pad2(b_U, 1, HP),
        'U_s': pad2(U_s, HP, 128), 'b_Us': pad2(b_Us, 1, 128),
    }


# ------------------------------------------------------------------ main
if __name__ == "__main__":
    vocab_size = 20
    hidden_size = 32
    latent_size = 16

    key = jax.random.PRNGKey(0)
    k_params, k_vec = jax.random.split(key)
    params = init_params(k_params, vocab_size, hidden_size, latent_size)

    # batch of 2 synthetic junction trees (global node idx, as in set_batch_nodeID)
    def make_tree(idx_offset, wids, edges):
        nodes = [Node(idx_offset + i, w) for i, w in enumerate(wids)]
        for a, b in edges:
            nodes[a].neighbors.append(nodes[b])
            nodes[b].neighbors.append(nodes[a])
        return Tree(nodes)

    tree1 = make_tree(0, [3, 7, 1, 12], [(0, 1), (1, 2), (1, 3)])
    tree2 = make_tree(4, [5, 9, 2], [(0, 1), (0, 2)])
    mol_batch = [tree1, tree2]

    mol_vec = jax.random.normal(k_vec, (len(mol_batch), latent_size), jnp.float32)

    pred_loss, stop_loss, pred_acc, stop_acc = jtnn_decoder_forward(
        mol_batch, mol_vec, params, hidden_size, latent_size, vocab_size)

    jax.block_until_ready(pred_loss)
    jax.block_until_ready(stop_loss)

    print("KERNEL_OK")
</pallas_src>

<mosaic_0001>
module attributes {stable_mosaic.version = 11 : i64} {
  func.func @gru_kernel(%arg0: memref<8x128xf32, #tpu.memory_space<vmem>>, %arg1: memref<8x8x128xf32, #tpu.memory_space<vmem>>, %arg2: memref<8x8x128xf32, #tpu.memory_space<vmem>>, %arg3: memref<128x384xf32, #tpu.memory_space<vmem>>, %arg4: memref<1x384xf32, #tpu.memory_space<vmem>>, %arg5: memref<128x128xf32, #tpu.memory_space<vmem>>, %arg6: memref<128x128xf32, #tpu.memory_space<vmem>>, %arg7: memref<128x128xf32, #tpu.memory_space<vmem>>, %arg8: memref<8x128xf32, #tpu.memory_space<vmem>>, %arg9: memref<8x128xf32, #tpu.memory_space<vmem>>) attributes {dimension_semantics = [], scalar_prefetch = 0 : i64, scratch_operands = 0 : i64, tpu.core_type = #tpu.core_type<tc>} {
    %c0 = arith.constant 0 : index
    %c0_0 = arith.constant 0 : index
    %0 = vector.load %arg0[%c0, %c0_0] : memref<8x128xf32, #tpu.memory_space<vmem>>, vector<8x128xf32>
    %c0_1 = arith.constant 0 : index
    %c0_2 = arith.constant 0 : index
    %c0_3 = arith.constant 0 : index
    %1 = vector.load %arg1[%c0_1, %c0_2, %c0_3] : memref<8x8x128xf32, #tpu.memory_space<vmem>>, vector<8x8x128xf32>
    %2 = vector.shape_cast %1 : vector<8x8x128xf32> to vector<64x128xf32>
    %cst = arith.constant dense<0.000000e+00> : vector<8x128xf32>
    %3 = vector.multi_reduction <add>, %1, %cst [1] : vector<8x8x128xf32> to vector<8x128xf32>
    %c0_4 = arith.constant 0 : index
    %c0_5 = arith.constant 0 : index
    %c0_6 = arith.constant 0 : index
    %4 = vector.load %arg2[%c0_4, %c0_5, %c0_6] : memref<8x8x128xf32, #tpu.memory_space<vmem>>, vector<8x8x128xf32>
    %cst_7 = arith.constant dense<0.000000e+00> : vector<8x128xf32>
    %5 = vector.multi_reduction <add>, %4, %cst_7 [1] : vector<8x8x128xf32> to vector<8x128xf32>
    %c0_8 = arith.constant 0 : index
    %c0_9 = arith.constant 0 : index
    %6 = vector.load %arg9[%c0_8, %c0_9] : memref<8x128xf32, #tpu.memory_space<vmem>>, vector<8x128xf32>
    tpu.vector_store %arg9[%c0_8, %c0_9], %5 {strides = array<i32>} : memref<8x128xf32, #tpu.memory_space<vmem>>, vector<8x128xf32>,
    %c0_10 = arith.constant 0 : index
    %c0_11 = arith.constant 0 : index
    %7 = vector.load %arg3[%c0_10, %c0_11] : memref<128x384xf32, #tpu.memory_space<vmem>>, vector<128x384xf32>
    %cst_12 = arith.constant dense<0.000000e+00> : vector<8x384xf32>
    %8 = tpu.matmul %0, %7, %cst_12 {dimension_numbers = #tpu.dot_dimension_numbers<[1], [0], [0], [1], [0, 0, 1, 1], [], []>} : vector<8x128xf32>, vector<128x384xf32>, vector<8x384xf32> -> vector<8x384xf32>
    %c0_13 = arith.constant 0 : index
    %c0_14 = arith.constant 0 : index
    %9 = vector.load %arg4[%c0_13, %c0_14] : memref<1x384xf32, #tpu.memory_space<vmem>>, vector<1x384xf32>
    %10 = vector.broadcast %9 : vector<1x384xf32> to vector<8x384xf32>
    %11 = arith.addf %8, %10 : vector<8x384xf32>
    %12 = vector.extract_strided_slice %11 {offsets = [0, 0], sizes = [8, 128], strides = [1, 1]} : vector<8x384xf32> to vector<8x128xf32>
    %13 = vector.extract_strided_slice %11 {offsets = [0, 128], sizes = [8, 128], strides = [1, 1]} : vector<8x384xf32> to vector<8x128xf32>
    %14 = vector.extract_strided_slice %11 {offsets = [0, 256], sizes = [8, 128], strides = [1, 1]} : vector<8x384xf32> to vector<8x128xf32>
    %c0_15 = arith.constant 0 : index
    %c0_16 = arith.constant 0 : index
    %15 = vector.load %arg5[%c0_15, %c0_16] : memref<128x128xf32, #tpu.memory_space<vmem>>, vector<128x128xf32>
    %cst_17 = arith.constant dense<0.000000e+00> : vector<8x128xf32>
    %16 = tpu.matmul %3, %15, %cst_17 {dimension_numbers = #tpu.dot_dimension_numbers<[1], [0], [0], [1], [0, 0, 1, 1], [], []>} : vector<8x128xf32>, vector<128x128xf32>, vector<8x128xf32> -> vector<8x128xf32>
    %17 = arith.addf %12, %16 : vector<8x128xf32>
    %18 = arith.negf %17 : vector<8x128xf32>
    %19 = math.exp %18 : vector<8x128xf32>
    %cst_18 = arith.constant 1.000000e+00 : f32
    %20 = vector.broadcast %cst_18 : f32 to vector<8x128xf32>
    %21 = arith.addf %20, %19 : vector<8x128xf32>
    %22 = arith.divf %20, %21 : vector<8x128xf32>
    %c0_19 = arith.constant 0 : index
    %c0_20 = arith.constant 0 : index
    %23 = vector.load %arg6[%c0_19, %c0_20] : memref<128x128xf32, #tpu.memory_space<vmem>>, vector<128x128xf32>
    %cst_21 = arith.constant dense<0.000000e+00> : vector<64x128xf32>
    %24 = tpu.matmul %2, %23, %cst_21 {dimension_numbers = #tpu.dot_dimension_numbers<[1], [0], [0], [1], [0, 0, 1, 1], [], []>} : vector<64x128xf32>, vector<128x128xf32>, vector<64x128xf32> -> vector<64x128xf32>
    %25 = vector.shape_cast %24 : vector<64x128xf32> to vector<8x8x128xf32>
    %26 = vector.shape_cast %13 : vector<8x128xf32> to vector<8x1x128xf32>
    %27 = vector.broadcast %26 : vector<8x1x128xf32> to vector<8x8x128xf32>
    %28 = arith.addf %25, %27 : vector<8x8x128xf32>
    %29 = arith.negf %28 : vector<8x8x128xf32>
    %30 = math.exp %29 : vector<8x8x128xf32>
    %cst_22 = arith.constant 1.000000e+00 : f32
    %31 = vector.broadcast %cst_22 : f32 to vector<8x8x128xf32>
    %32 = arith.addf %31, %30 : vector<8x8x128xf32>
    %33 = arith.divf %31, %32 : vector<8x8x128xf32>
    %34 = arith.mulf %33, %1 : vector<8x8x128xf32>
    %cst_23 = arith.constant dense<0.000000e+00> : vector<8x128xf32>
    %35 = vector.multi_reduction <add>, %34, %cst_23 [1] : vector<8x8x128xf32> to vector<8x128xf32>
    %c0_24 = arith.constant 0 : index
    %c0_25 = arith.constant 0 : index
    %36 = vector.load %arg7[%c0_24, %c0_25] : memref<128x128xf32, #tpu.memory_space<vmem>>, vector<128x128xf32>
    %cst_26 = arith.constant dense<0.000000e+00> : vector<8x128xf32>
    %37 = tpu.matmul %35, %36, %cst_26 {dimension_numbers = #tpu.dot_dimension_numbers<[1], [0], [0], [1], [0, 0, 1, 1], [], []>} : vector<8x128xf32>, vector<128x128xf32>, vector<8x128xf32> -> vector<8x128xf32>
    %38 = arith.addf %14, %37 : vector<8x128xf32>
    %39 = math.tanh %38 : vector<8x128xf32>
    %cst_27 = arith.constant 1.000000e+00 : f32
    %40 = vector.broadcast %cst_27 : f32 to vector<8x128xf32>
    %41 = arith.subf %40, %22 : vector<8x128xf32>
    %42 = arith.mulf %41, %3 : vector<8x128xf32>
    %43 = arith.mulf %22, %39 : vector<8x128xf32>
    %44 = arith.addf %42, %43 : vector<8x128xf32>
    %c0_28 = arith.constant 0 : index
    %c0_29 = arith.constant 0 : index
    %45 = vector.load %arg8[%c0_28, %c0_29] : memref<8x128xf32, #tpu.memory_space<vmem>>, vector<8x128xf32>
    tpu.vector_store %arg8[%c0_28, %c0_29], %44 {strides = array<i32>} : memref<8x128xf32, #tpu.memory_space<vmem>>, vector<8x128xf32>,
    return
  }
}

</mosaic_0001>

<llo_original>
// kernel: gru_step.1
$region0: #{gru_step.1}
  #allocation0 [shape = 'u32[]', space=smem, size = 0x4, offset = 0x4, fixed_abs, tag = 'smem constant byte address 0x4 - core index']
  #allocation1 [shape = 'u32[144,128]{1,0:T(1,128)}', space=vmem, size = 0x12000, scoped, tag = 'internal scratch']
  %s0 = inlined_call_operand.hbm [shape: f32[8,128], index: 0, kind: input, shape index: {}]
  %s1 = inlined_call_operand.hbm [shape: f32[8,8,128], index: 1, kind: input, shape index: {}]
  %s2 = inlined_call_operand.hbm [shape: f32[8,8,128], index: 2, kind: input, shape index: {}]
  %s3 = inlined_call_operand.hbm [shape: f32[128,384], index: 3, kind: input, shape index: {}]
  %s4 = inlined_call_operand.vmem [shape: f32[1,384], index: 4, kind: input, shape index: {}]
  %s5 = inlined_call_operand.hbm [shape: f32[128,128], index: 5, kind: input, shape index: {}]
  %s6 = inlined_call_operand.hbm [shape: f32[128,128], index: 6, kind: input, shape index: {}]
  %s7 = inlined_call_operand.hbm [shape: f32[128,128], index: 7, kind: input, shape index: {}]
  %s8 = inlined_call_operand.hbm [shape: f32[8,128], index: 8, kind: output, shape index: {0}]
  %s9 = inlined_call_operand.hbm [shape: f32[8,128], index: 9, kind: output, shape index: {1}]
  %10 = xla_tuple %s8, %s9
  %s11 = sld [smem:[#allocation0]]
  $region78: #{gru_step.1} parent=0
    _
  %s13 = ssub.s32 1, %s11
  %s14 = scalar_select 0, %s13, %s11
  $region1: #{gru_step.1} parent=0
    #allocation2 [shape = 'u8[4096]{0}', space=vmem, size = 0x1000, scoped, tag = 'input window, operand 0, single buffered']
    #allocation3 [shape = 's32[1]{0}', space=sflag, size = 0x4, scoped, tag = 'scoped memory for gru_step.1']
    #allocation4 [shape = 's32[1]{0}', space=sflag, size = 0x4, scoped, tag = 'scoped memory for gru_step.1']
    #allocation5 [shape = 'u8[32768]{0}', space=vmem, size = 0x8000, scoped, tag = 'input window, operand 1, single buffered']
    #allocation6 [shape = 's32[1]{0}', space=sflag, size = 0x4, scoped, tag = 'scoped memory for gru_step.1']
    #allocation7 [shape = 'u8[32768]{0}', space=vmem, size = 0x8000, scoped, tag = 'input window, operand 2, single buffered']
    #allocation8 [shape = 'u8[196608]{0}', space=vmem, size = 0x30000, scoped, tag = 'input window, operand 3, single buffered']
    #allocation9 [shape = 's32[1]{0}', space=sflag, size = 0x4, scoped, tag = 'scoped memory for gru_step.1']
    #allocation10 [shape = 'u8[65536]{0}', space=vmem, size = 0x10000, scoped, tag = 'input window, operand 5, single buffered']
    #allocation11 [shape = 'u8[65536]{0}', space=vmem, size = 0x10000, scoped, tag = 'input window, operand 6, single buffered']
    #allocation12 [shape = 's32[1]{0}', space=sflag, size = 0x4, scoped, tag = 'scoped memory for gru_step.1']
    #allocation13 [shape = 'u8[65536]{0}', space=vmem, size = 0x10000, scoped, tag = 'input window, operand 7, single buffered']
    #allocation14 [shape = 'u8[4096]{0}', space=vmem, size = 0x1000, scoped, tag = 'output window, operand 0, single buffered']
    #allocation15 [shape = 'u8[4096]{0}', space=vmem, size = 0x1000, scoped, tag = 'output window, operand 1, single buffered']
    #allocation16 [shape = 's32[1]{0}', space=sflag, size = 0x4, scoped, tag = 'scoped memory for gru_step.1']
    %15 = vsyncpa [#allocation3], 0
    %16 = vsyncpa [#allocation6], 0
    %17 = vsyncpa [#allocation9], 0
    %18 = vsyncpa [#allocation12], 0
    %19 = vsyncpa [#allocation4], 0
    %20 = vsyncpa [#allocation16], 0
    // Predicated region
    $region2: #{gru_step.1} parent=1 // pred_check
      _
    $region3: #{gru_step.1} parent=1 // pred_check_branch
      %22 = sbr.rel (0) target = $region5
    $region4: #{gru_step.1} parent=1 // pred_region
      %s24 = ssub.s32 128, 128
      %25 = vsyncadd [#allocation3], %s24
      %s27 = sshll.u32 [#allocation2], 4
      %s28 = int_to_ptr.vmem [resolvable:$true] %s27
      %30 = dma.hbm_to_vmem [thread:$0]  %s0, 128, %s28, [#allocation3]
    $region5: #{gru_step.1} parent=1 // pred_fallthru
      _
    // Predicated region
    $region6: #{gru_step.1} parent=1 // pred_check
      _
    $region7: #{gru_step.1} parent=1 // pred_check_branch
      %32 = sbr.rel (0) target = $region9
    $region8: #{gru_step.1} parent=1 // pred_region
      %s34 = ssub.s32 1024, 1024
      %35 = vsyncadd [#allocation6], %s34
      %s36 = sshll.u32 [#allocation5], 4
      %s37 = int_to_ptr.vmem [resolvable:$true] %s36
      %42 = dma.hbm_to_vmem [thread:$0]  %s1, 1024, %s37, [#allocation6], 128, 128, 8
    $region9: #{gru_step.1} parent=1 // pred_fallthru
      _
    // Predicated region
    $region10: #{gru_step.1} parent=1 // pred_check
      _
    $region11: #{gru_step.1} parent=1 // pred_check_branch
      %44 = sbr.rel (0) target = $region13
    $region12: #{gru_step.1} parent=1 // pred_region
      %s46 = ssub.s32 1024, 1024
      %47 = vsyncadd [#allocation6], %s46
      %s48 = sshll.u32 [#allocation7], 4
      %s49 = int_to_ptr.vmem [resolvable:$true] %s48
      %54 = dma.hbm_to_vmem [thread:$0]  %s2, 1024, %s49, [#allocation6], 128, 128, 8
    $region13: #{gru_step.1} parent=1 // pred_fallthru
      _
    // Predicated region
    $region14: #{gru_step.1} parent=1 // pred_check
      _
    $region15: #{gru_step.1} parent=1 // pred_check_branch
      %56 = sbr.rel (0) target = $region17
    $region16: #{gru_step.1} parent=1 // pred_region
      %s58 = ssub.s32 6144, 6144
      %59 = vsyncadd [#allocation9], %s58
      %s60 = sshll.u32 [#allocation8], 4
      %s61 = int_to_ptr.vmem [resolvable:$true] %s60
      %66 = dma.hbm_to_vmem [thread:$0]  %s3, 6144, %s61, [#allocation9], 384, 384, 24
    $region17: #{gru_step.1} parent=1 // pred_fallthru
      _
    // Predicated region
    $region18: #{gru_step.1} parent=1 // pred_check
      _
    $region19: #{gru_step.1} parent=1 // pred_check_branch
      %68 = sbr.rel (0) target = $region21
    $region20: #{gru_step.1} parent=1 // pred_region
      _
    $region21: #{gru_step.1} parent=1 // pred_fallthru
      _
    // Predicated region
    $region22: #{gru_step.1} parent=1 // pred_check
      _
    $region23: #{gru_step.1} parent=1 // pred_check_branch
      %70 = sbr.rel (0) target = $region25
    $region24: #{gru_step.1} parent=1 // pred_region
      %s72 = ssub.s32 2048, 2048
      %73 = vsyncadd [#allocation9], %s72
      %s74 = sshll.u32 [#allocation10], 4
      %s75 = int_to_ptr.vmem [resolvable:$true] %s74
      %80 = dma.hbm_to_vmem [thread:$0]  %s5, 2048, %s75, [#allocation9], 128, 128, 8
    $region25: #{gru_step.1} parent=1 // pred_fallthru
      _
    // Predicated region
    $region26: #{gru_step.1} parent=1 // pred_check
      _
    $region27: #{gru_step.1} parent=1 // pred_check_branch
      %82 = sbr.rel (0) target = $region29
    $region28: #{gru_step.1} parent=1 // pred_region
      %s84 = ssub.s32 2048, 2048
      %85 = vsyncadd [#allocation12], %s84
      %s86 = sshll.u32 [#allocation11], 4
      %s87 = int_to_ptr.vmem [resolvable:$true] %s86
      %92 = dma.hbm_to_vmem [thread:$0]  %s6, 2048, %s87, [#allocation12], 128, 128, 8
    $region29: #{gru_step.1} parent=1 // pred_fallthru
      _
    // Predicated region
    $region30: #{gru_step.1} parent=1 // pred_check
      _
    $region31: #{gru_step.1} parent=1 // pred_check_branch
      %94 = sbr.rel (0) target = $region33
    $region32: #{gru_step.1} parent=1 // pred_region
      %s96 = ssub.s32 2048, 2048
      %97 = vsyncadd [#allocation12], %s96
      %s98 = sshll.u32 [#allocation13], 4
      %s99 = int_to_ptr.vmem [resolvable:$true] %s98
      %104 = dma.hbm_to_vmem [thread:$0]  %s7, 2048, %s99, [#allocation12], 128, 128, 8
    $region33: #{gru_step.1} parent=1 // pred_fallthru
      _
    // Predicated region
    $region34: #{gru_step.1} parent=1 // pred_check
      _
    $region35: #{gru_step.1} parent=1 // pred_check_branch
      %106 = sbr.rel (0) target = $region37
    $region36: #{gru_step.1} parent=1 // pred_region
      %107 = dma.done [#allocation3], 128
    $region37: #{gru_step.1} parent=1 // pred_fallthru
      _
    // Predicated region
    $region38: #{gru_step.1} parent=1 // pred_check
      _
    $region39: #{gru_step.1} parent=1 // pred_check_branch
      %109 = sbr.rel (0) target = $region41
    $region40: #{gru_step.1} parent=1 // pred_region
      %110 = dma.done [#allocation6], 1024
    $region41: #{gru_step.1} parent=1 // pred_fallthru
      _
    // Predicated region
    $region42: #{gru_step.1} parent=1 // pred_check
      _
    $region43: #{gru_step.1} parent=1 // pred_check_branch
      %112 = sbr.rel (0) target = $region45
    $region44: #{gru_step.1} parent=1 // pred_region
      %113 = dma.done [#allocation6], 1024
    $region45: #{gru_step.1} parent=1 // pred_fallthru
      _
    // Predicated region
    $region46: #{gru_step.1} parent=1 // pred_check
      _
    $region47: #{gru_step.1} parent=1 // pred_check_branch
      %115 = sbr.rel (0) target = $region49
    $region48: #{gru_step.1} parent=1 // pred_region
      %116 = dma.done [#allocation9], 6144
    $region49: #{gru_step.1} parent=1 // pred_fallthru
      _
    // Predicated region
    $region50: #{gru_step.1} parent=1 // pred_check
      _
    $region51: #{gru_step.1} parent=1 // pred_check_branch
      %118 = sbr.rel (0) target = $region53
    $region52: #{gru_step.1} parent=1 // pred_region
      %119 = dma.done [#allocation9], 2048
    $region53: #{gru_step.1} parent=1 // pred_fallthru
      _
    // Predicated region
    $region54: #{gru_step.1} parent=1 // pred_check
      _
    $region55: #{gru_step.1} parent=1 // pred_check_branch
      %121 = sbr.rel (0) target = $region57
    $region56: #{gru_step.1} parent=1 // pred_region
      %122 = dma.done [#allocation12], 2048
    $region57: #{gru_step.1} parent=1 // pred_fallthru
      _
    // Predicated region
    $region58: #{gru_step.1} parent=1 // pred_check
      _
    $region59: #{gru_step.1} parent=1 // pred_check_branch
      %124 = sbr.rel (0) target = $region61
    $region60: #{gru_step.1} parent=1 // pred_region
      %125 = dma.done [#allocation12], 2048
    $region61: #{gru_step.1} parent=1 // pred_fallthru
      _
    %v126 = vld [vmem:[#allocation2] sm:$0xff]
    %v127 = vld [vmem:[#allocation5] sm:$0xff]
    %v128 = vld [vmem:[#allocation5 + $0x8] sm:$0xff]
    %v129 = vld [vmem:[#allocation5 + $0x10] sm:$0xff]
    %v130 = vld [vmem:[#allocation5 + $0x18] sm:$0xff]
    %v131 = vld [vmem:[#allocation5 + $0x20] sm:$0xff]
    %v132 = vld [vmem:[#allocation5 + $0x28] sm:$0xff]
    %v133 = vld [vmem:[#allocation5 + $0x30] sm:$0xff]
    %v134 = vld [vmem:[#allocation5 + $0x38] sm:$0xff]
    %v135 = vrot.slane %v127, 4
    %v136 = vadd.f32 %v127, %v135
    %v137 = vrot.slane %v136, 2
    %v138 = vadd.f32 %v136, %v137
    %v139 = vrot.slane %v138, 1
    %v140 = vadd.f32 %v138, %v139
    %v141 = vrot.slane %v128, 4
    %v142 = vadd.f32 %v128, %v141
    %v143 = vrot.slane %v142, 2
    %v144 = vadd.f32 %v142, %v143
    %v145 = vrot.slane %v144, 1
    %v146 = vadd.f32 %v144, %v145
    %v147 = vrot.slane %v129, 4
    %v148 = vadd.f32 %v129, %v147
    %v149 = vrot.slane %v148, 2
    %v150 = vadd.f32 %v148, %v149
    %v151 = vrot.slane %v150, 1
    %v152 = vadd.f32 %v150, %v151
    %v153 = vrot.slane %v130, 4
    %v154 = vadd.f32 %v130, %v153
    %v155 = vrot.slane %v154, 2
    %v156 = vadd.f32 %v154, %v155
    %v157 = vrot.slane %v156, 1
    %v158 = vadd.f32 %v156, %v157
    %v159 = vrot.slane %v131, 4
    %v160 = vadd.f32 %v131, %v159
    %v161 = vrot.slane %v160, 2
    %v162 = vadd.f32 %v160, %v161
    %v163 = vrot.slane %v162, 1
    %v164 = vadd.f32 %v162, %v163
    %v165 = vrot.slane %v132, 4
    %v166 = vadd.f32 %v132, %v165
    %v167 = vrot.slane %v166, 2
    %v168 = vadd.f32 %v166, %v167
    %v169 = vrot.slane %v168, 1
    %v170 = vadd.f32 %v168, %v169
    %v171 = vrot.slane %v133, 4
    %v172 = vadd.f32 %v133, %v171
    %v173 = vrot.slane %v172, 2
    %v174 = vadd.f32 %v172, %v173
    %v175 = vrot.slane %v174, 1
    %v176 = vadd.f32 %v174, %v175
    %v177 = vrot.slane %v134, 4
    %v178 = vadd.f32 %v134, %v177
    %v179 = vrot.slane %v178, 2
    %v180 = vadd.f32 %v178, %v179
    %v181 = vrot.slane %v180, 1
    %v182 = vadd.f32 %v180, %v181
    %v183 = vld [vmem:[#allocation7] sm:$0xff]
    %v184 = vld [vmem:[#allocation7 + $0x8] sm:$0xff]
    %v185 = vld [vmem:[#allocation7 + $0x10] sm:$0xff]
    %v186 = vld [vmem:[#allocation7 + $0x18] sm:$0xff]
    %v187 = vld [vmem:[#allocation7 + $0x20] sm:$0xff]
    %v188 = vld [vmem:[#allocation7 + $0x28] sm:$0xff]
    %v189 = vld [vmem:[#allocation7 + $0x30] sm:$0xff]
    %v190 = vld [vmem:[#allocation7 + $0x38] sm:$0xff]
    %v191 = vrot.slane %v183, 4
    %v192 = vadd.f32 %v183, %v191
    %v193 = vrot.slane %v192, 2
    %v194 = vadd.f32 %v192, %v193
    %v195 = vrot.slane %v194, 1
    %v196 = vadd.f32 %v194, %v195
    %v197 = vrot.slane %v184, 4
    %v198 = vadd.f32 %v184, %v197
    %v199 = vrot.slane %v198, 2
    %v200 = vadd.f32 %v198, %v199
    %v201 = vrot.slane %v200, 1
    %v202 = vadd.f32 %v200, %v201
    %v203 = vrot.slane %v185, 4
    %v204 = vadd.f32 %v185, %v203
    %v205 = vrot.slane %v204, 2
    %v206 = vadd.f32 %v204, %v205
    %v207 = vrot.slane %v206, 1
    %v208 = vadd.f32 %v206, %v207
    %v209 = vrot.slane %v186, 4
    %v210 = vadd.f32 %v186, %v209
    %v211 = vrot.slane %v210, 2
    %v212 = vadd.f32 %v210, %v211
    %v213 = vrot.slane %v212, 1
    %v214 = vadd.f32 %v212, %v213
    %v215 = vrot.slane %v187, 4
    %v216 = vadd.f32 %v187, %v215
    %v217 = vrot.slane %v216, 2
    %v218 = vadd.f32 %v216, %v217
    %v219 = vrot.slane %v218, 1
    %v220 = vadd.f32 %v218, %v219
    %v221 = vrot.slane %v188, 4
    %v222 = vadd.f32 %v188, %v221
    %v223 = vrot.slane %v222, 2
    %v224 = vadd.f32 %v222, %v223
    %v225 = vrot.slane %v224, 1
    %v226 = vadd.f32 %v224, %v225
    %v227 = vrot.slane %v189, 4
    %v228 = vadd.f32 %v189, %v227
    %v229 = vrot.slane %v228, 2
    %v230 = vadd.f32 %v228, %v229
    %v231 = vrot.slane %v230, 1
    %v232 = vadd.f32 %v230, %v231
    %v233 = vrot.slane %v190, 4
    %v234 = vadd.f32 %v190, %v233
    %v235 = vrot.slane %v234, 2
    %v236 = vadd.f32 %v234, %v235
    %v237 = vrot.slane %v236, 1
    %v238 = vadd.f32 %v236, %v237
    %vm247 = vcmask 1041409
    %v248 = vsel %vm247, %v202, %v196
    %vm249 = vcmask 1042434
    %v250 = vsel %vm249, %v208, %v248
    %vm251 = vcmask 1043459
    %v252 = vsel %vm251, %v214, %v250
    %vm253 = vcmask 1044484
    %v254 = vsel %vm253, %v220, %v252
    %vm255 = vcmask 1045509
    %v256 = vsel %vm255, %v226, %v254
    %vm257 = vcmask 1046534
    %v258 = vsel %vm257, %v232, %v256
    %vm259 = vcmask 1047559
    %v260 = vsel %vm259, %v238, %v258
    %262 = vst [vmem:[#allocation15] sm:$0xff] %v260
    %v263 = vld [vmem:[#allocation8] sm:$0xff]
    %v264 = vld [vmem:[#allocation8 + $0x8] sm:$0xff]
    %v265 = vld [vmem:[#allocation8 + $0x10] sm:$0xff]
    %v266 = vld [vmem:[#allocation8 + $0x18] sm:$0xff]
    %v267 = vld [vmem:[#allocation8 + $0x20] sm:$0xff]
    %v268 = vld [vmem:[#allocation8 + $0x28] sm:$0xff]
    %v269 = vld [vmem:[#allocation8 + $0x30] sm:$0xff]
    %v270 = vld [vmem:[#allocation8 + $0x38] sm:$0xff]
    %v271 = vld [vmem:[#allocation8 + $0x40] sm:$0xff]
    %v272 = vld [vmem:[#allocation8 + $0x48] sm:$0xff]
    %v273 = vld [vmem:[#allocation8 + $0x50] sm:$0xff]
    %v274 = vld [vmem:[#allocation8 + $0x58] sm:$0xff]
    %v275 = vld [vmem:[#allocation8 + $0x60] sm:$0xff]
    %v276 = vld [vmem:[#allocation8 + $0x68] sm:$0xff]
    %v277 = vld [vmem:[#allocation8 + $0x70] sm:$0xff]
    %v278 = vld [vmem:[#allocation8 + $0x78] sm:$0xff]
    %v279 = vld [vmem:[#allocation8 + $0x80] sm:$0xff]
    %v280 = vld [vmem:[#allocation8 + $0x88] sm:$0xff]
    %v281 = vld [vmem:[#allocation8 + $0x90] sm:$0xff]
    %v282 = vld [vmem:[#allocation8 + $0x98] sm:$0xff]
    %v283 = vld [vmem:[#allocation8 + $0xa0] sm:$0xff]
    %v284 = vld [vmem:[#allocation8 + $0xa8] sm:$0xff]
    %v285 = vld [vmem:[#allocation8 + $0xb0] sm:$0xff]
    %v286 = vld [vmem:[#allocation8 + $0xb8] sm:$0xff]
    %v287 = vld [vmem:[#allocation8 + $0xc0] sm:$0xff]
    %v288 = vld [vmem:[#allocation8 + $0xc8] sm:$0xff]
    %v289 = vld [vmem:[#allocation8 + $0xd0] sm:$0xff]
    %v290 = vld [vmem:[#allocation8 + $0xd8] sm:$0xff]
    %v291 = vld [vmem:[#allocation8 + $0xe0] sm:$0xff]
    %v292 = vld [vmem:[#allocation8 + $0xe8] sm:$0xff]
    %v293 = vld [vmem:[#allocation8 + $0xf0] sm:$0xff]
    %v294 = vld [vmem:[#allocation8 + $0xf8] sm:$0xff]
    %v295 = vld [vmem:[#allocation8 + $0x100] sm:$0xff]
    %v296 = vld [vmem:[#allocation8 + $0x108] sm:$0xff]
    %v297 = vld [vmem:[#allocation8 + $0x110] sm:$0xff]
    %v298 = vld [vmem:[#allocation8 + $0x118] sm:$0xff]
    %v299 = vld [vmem:[#allocation8 + $0x120] sm:$0xff]
    %v300 = vld [vmem:[#allocation8 + $0x128] sm:$0xff]
    %v301 = vld [vmem:[#allocation8 + $0x130] sm:$0xff]
    %v302 = vld [vmem:[#allocation8 + $0x138] sm:$0xff]
    %v303 = vld [vmem:[#allocation8 + $0x140] sm:$0xff]
    %v304 = vld [vmem:[#allocation8 + $0x148] sm:$0xff]
    %v305 = vld [vmem:[#allocation8 + $0x150] sm:$0xff]
    %v306 = vld [vmem:[#allocation8 + $0x158] sm:$0xff]
    %v307 = vld [vmem:[#allocation8 + $0x160] sm:$0xff]
    %v308 = vld [vmem:[#allocation8 + $0x168] sm:$0xff]
    %v309 = vld [vmem:[#allocation8 + $0x170] sm:$0xff]
    %v310 = vld [vmem:[#allocation8 + $0x178] sm:$0xff]
    %v311 = vld [vmem:[%s4] sm:$0x7]
    %v313 = vlaneseq
    %v314 = vshrl.u32 %v313, 7
    %v315 = vsub.s32 0, %v314
    %v316 = vrot.slane %v311, %v315
    %v317 = vlaneseq
    %v318 = vshrl.u32 %v317, 7
    %v319 = vsub.s32 1, %v318
    %v320 = vrot.slane %v311, %v319
    %v321 = vlaneseq
    %v322 = vshrl.u32 %v321, 7
    %v323 = vsub.s32 2, %v322
    %v324 = vrot.slane %v311, %v323
    %328 = vmatprep.subr.mxu0 %v264
    %329 = vmatpush1.msra.mxu0 %v263
    %330 = vmatprep.subr.mxu0 %v267
    %331 = vmatpush1.msra.mxu0 %v266
    %332 = vmatprep.subr.mxu0 %v270
    %333 = vmatpush1.msra.mxu0 %v269
    %334 = vmatprep.subr.mxu0 %v273
    %335 = vmatpush1.msra.mxu0 %v272
    %336 = vmatprep.subr.mxu0 %v276
    %337 = vmatpush1.msra.mxu0 %v275
    %338 = vmatprep.subr.mxu0 %v279
    %339 = vmatpush1.msra.mxu0 %v278
    %340 = vmatprep.subr.mxu0 %v282
    %341 = vmatpush1.msra.mxu0 %v281
    %342 = vmatprep.subr.mxu0 %v285
    %343 = vmatpush1.msra.mxu0 %v284
    %344 = vmatprep.subr.mxu0 %v288
    %345 = vmatpush1.msra.mxu0 %v287
    %346 = vmatprep.subr.mxu0 %v291
    %347 = vmatpush1.msra.mxu0 %v290
    %348 = vmatprep.subr.mxu0 %v294
    %349 = vmatpush1.msra.mxu0 %v293
    %350 = vmatprep.subr.mxu0 %v297
    %351 = vmatpush1.msra.mxu0 %v296
    %352 = vmatprep.subr.mxu0 %v300
    %353 = vmatpush1.msra.mxu0 %v299
    %354 = vmatprep.subr.mxu0 %v303
    %355 = vmatpush1.msra.mxu0 %v302
    %356 = vmatprep.subr.mxu0 %v306
    %357 = vmatpush1.msra.mxu0 %v305
    %358 = vmatprep.subr.mxu0 %v309
    %359 = vmatpush1.msra.mxu0 %v308
    %360 = vmatprep.subr.mxu0 0.0
    %361 = vmatpush1.msra.mxu0 0.0
    %362 = vmatprep.subr.mxu0 0.0
    %363 = vmatpush1.msra.mxu0 0.0
    %364 = vmatprep.subr.mxu0 0.0
    %365 = vmatpush1.msra.mxu0 0.0
    %366 = vmatprep.subr.mxu0 0.0
    %367 = vmatpush1.msra.mxu0 0.0
    %368 = vmatprep.subr.mxu0 0.0
    %369 = vmatpush1.msra.mxu0 0.0
    %370 = vmatprep.subr.mxu0 0.0
    %371 = vmatpush1.msra.mxu0 0.0
    %372 = vmatprep.subr.mxu0 0.0
    %373 = vmatpush1.msra.mxu0 0.0
    %374 = vmatprep.subr.mxu0 0.0
    %375 = vmatpush1.msra.mxu0 0.0
    %376 = vmatprep.subr.mxu0 0.0
    %377 = vmatpush1.msra.mxu0 0.0
    %378 = vmatprep.subr.mxu0 0.0
    %379 = vmatpush1.msra.mxu0 0.0
    %380 = vmatprep.subr.mxu0 0.0
    %381 = vmatpush1.msra.mxu0 0.0
    %382 = vmatprep.subr.mxu0 0.0
    %383 = vmatpush1.msra.mxu0 0.0
    %384 = vmatprep.subr.mxu0 0.0
    %385 = vmatpush1.msra.mxu0 0.0
    %386 = vmatprep.subr.mxu0 0.0
    %387 = vmatpush1.msra.mxu0 0.0
    %388 = vmatprep.subr.mxu0 0.0
    %389 = vmatpush1.msra.mxu0 0.0
    %390 = vmatprep.subr.mxu0 0.0
    %391 = vmatpush1.msra.mxu0 0.0
    %392 = vmatprep.mubr.f32.mxu0 0.0
    %393 = vmatmul.mubr.f32.gmra.mrb[0].mxu0 %v126
    %v394 = vpop.f32.mrb[0].mxu0
    %v395 = vadd.f32 %v316, %v394
    %v396 = vpop.f32.mrb[0].mxu0
    %v397 = vadd.f32 %v320, %v396
    %398 = vdwg.mxu0
    %399 = vmatprep.subr.mxu0 0.0
    %400 = vmatpush1.msra.mxu0 %v265
    %401 = vmatprep.subr.mxu0 0.0
    %402 = vmatpush1.msra.mxu0 %v268
    %403 = vmatprep.subr.mxu0 0.0
    %404 = vmatpush1.msra.mxu0 %v271
    %405 = vmatprep.subr.mxu0 0.0
    %406 = vmatpush1.msra.mxu0 %v274
    %407 = vmatprep.subr.mxu0 0.0
    %408 = vmatpush1.msra.mxu0 %v277
    %409 = vmatprep.subr.mxu0 0.0
    %410 = vmatpush1.msra.mxu0 %v280
    %411 = vmatprep.subr.mxu0 0.0
    %412 = vmatpush1.msra.mxu0 %v283
    %413 = vmatprep.subr.mxu0 0.0
    %414 = vmatpush1.msra.mxu0 %v286
    %415 = vmatprep.subr.mxu0 0.0
    %416 = vmatpush1.msra.mxu0 %v289
    %417 = vmatprep.subr.mxu0 0.0
    %418 = vmatpush1.msra.mxu0 %v292
    %419 = vmatprep.subr.mxu0 0.0
    %420 = vmatpush1.msra.mxu0 %v295
    %421 = vmatprep.subr.mxu0 0.0
    %422 = vmatpush1.msra.mxu0 %v298
    %423 = vmatprep.subr.mxu0 0.0
    %424 = vmatpush1.msra.mxu0 %v301
    %425 = vmatprep.subr.mxu0 0.0
    %426 = vmatpush1.msra.mxu0 %v304
    %427 = vmatprep.subr.mxu0 0.0
    %428 = vmatpush1.msra.mxu0 %v307
    %429 = vmatprep.subr.mxu0 0.0
    %430 = vmatpush1.msra.mxu0 %v310
    %431 = vmatprep.subr.mxu0 0.0
    %432 = vmatpush1.msra.mxu0 0.0
    %433 = vmatprep.subr.mxu0 0.0
    %434 = vmatpush1.msra.mxu0 0.0
    %435 = vmatprep.subr.mxu0 0.0
    %436 = vmatpush1.msra.mxu0 0.0
    %437 = vmatprep.subr.mxu0 0.0
    %438 = vmatpush1.msra.mxu0 0.0
    %439 = vmatprep.subr.mxu0 0.0
    %440 = vmatpush1.msra.mxu0 0.0
    %441 = vmatprep.subr.mxu0 0.0
    %442 = vmatpush1.msra.mxu0 0.0
    %443 = vmatprep.subr.mxu0 0.0
    %444 = vmatpush1.msra.mxu0 0.0
    %445 = vmatprep.subr.mxu0 0.0
    %446 = vmatpush1.msra.mxu0 0.0
    %447 = vmatprep.subr.mxu0 0.0
    %448 = vmatpush1.msra.mxu0 0.0
    %449 = vmatprep.subr.mxu0 0.0
    %450 = vmatpush1.msra.mxu0 0.0
    %451 = vmatprep.subr.mxu0 0.0
    %452 = vmatpush1.msra.mxu0 0.0
    %453 = vmatprep.subr.mxu0 0.0
    %454 = vmatpush1.msra.mxu0 0.0
    %455 = vmatprep.subr.mxu0 0.0
    %456 = vmatpush1.msra.mxu0 0.0
    %457 = vmatprep.subr.mxu0 0.0
    %458 = vmatpush1.msra.mxu0 0.0
    %459 = vmatprep.subr.mxu0 0.0
    %460 = vmatpush1.msra.mxu0 0.0
    %461 = vmatprep.subr.mxu0 0.0
    %462 = vmatpush1.msra.mxu0 0.0
    %463 = vmatprep.mubr.f32.mxu0 0.0
    %464 = vmatmul.mubr.f32.gmra.mrb[0].mxu0 %v126
    %v465 = vpop.f32.mrb[0].mxu0
    %v466 = vadd.f32 %v324, %v465
    %v467 = vpop.f32.mrb[0].mxu0
    %468 = vdwg.mxu0
    %v469 = vld [vmem:[#allocation10] sm:$0xff]
    %v470 = vld [vmem:[#allocation10 + $0x8] sm:$0xff]
    %v471 = vld [vmem:[#allocation10 + $0x10] sm:$0xff]
    %v472 = vld [vmem:[#allocation10 + $0x18] sm:$0xff]
    %v473 = vld [vmem:[#allocation10 + $0x20] sm:$0xff]
    %v474 = vld [vmem:[#allocation10 + $0x28] sm:$0xff]
    %v475 = vld [vmem:[#allocation10 + $0x30] sm:$0xff]
    %v476 = vld [vmem:[#allocation10 + $0x38] sm:$0xff]
    %v477 = vld [vmem:[#allocation10 + $0x40] sm:$0xff]
    %v478 = vld [vmem:[#allocation10 + $0x48] sm:$0xff]
    %v479 = vld [vmem:[#allocation10 + $0x50] sm:$0xff]
    %v480 = vld [vmem:[#allocation10 + $0x58] sm:$0xff]
    %v481 = vld [vmem:[#allocation10 + $0x60] sm:$0xff]
    %v482 = vld [vmem:[#allocation10 + $0x68] sm:$0xff]
    %v483 = vld [vmem:[#allocation10 + $0x70] sm:$0xff]
    %v484 = vld [vmem:[#allocation10 + $0x78] sm:$0xff]
    %v493 = vsel %vm247, %v146, %v140
    %v494 = vsel %vm249, %v152, %v493
    %v495 = vsel %vm251, %v158, %v494
    %v496 = vsel %vm253, %v164, %v495
    %v497 = vsel %vm255, %v170, %v496
    %v498 = vsel %vm257, %v176, %v497
    %v499 = vsel %vm259, %v182, %v498
    %501 = vmatprep.subr.mxu0 0.0
    %502 = vmatpush1.msra.mxu0 %v469
    %503 = vmatprep.subr.mxu0 0.0
    %504 = vmatpush1.msra.mxu0 %v470
    %505 = vmatprep.subr.mxu0 0.0
    %506 = vmatpush1.msra.mxu0 %v471
    %507 = vmatprep.subr.mxu0 0.0
    %508 = vmatpush1.msra.mxu0 %v472
    %509 = vmatprep.subr.mxu0 0.0
    %510 = vmatpush1.msra.mxu0 %v473
    %511 = vmatprep.subr.mxu0 0.0
    %512 = vmatpush1.msra.mxu0 %v474
    %513 = vmatprep.subr.mxu0 0.0
    %514 = vmatpush1.msra.mxu0 %v475
    %515 = vmatprep.subr.mxu0 0.0
    %516 = vmatpush1.msra.mxu0 %v476
    %517 = vmatprep.subr.mxu0 0.0
    %518 = vmatpush1.msra.mxu0 %v477
    %519 = vmatprep.subr.mxu0 0.0
    %520 = vmatpush1.msra.mxu0 %v478
    %521 = vmatprep.subr.mxu0 0.0
    %522 = vmatpush1.msra.mxu0 %v479
    %523 = vmatprep.subr.mxu0 0.0
    %524 = vmatpush1.msra.mxu0 %v480
    %525 = vmatprep.subr.mxu0 0.0
    %526 = vmatpush1.msra.mxu0 %v481
    %527 = vmatprep.subr.mxu0 0.0
    %528 = vmatpush1.msra.mxu0 %v482
    %529 = vmatprep.subr.mxu0 0.0
    %530 = vmatpush1.msra.mxu0 %v483
    %531 = vmatprep.subr.mxu0 0.0
    %532 = vmatpush1.msra.mxu0 %v484
    %533 = vmatprep.subr.mxu0 0.0
    %534 = vmatpush1.msra.mxu0 0.0
    %535 = vmatprep.subr.mxu0 0.0
    %536 = vmatpush1.msra.mxu0 0.0
    %537 = vmatprep.subr.mxu0 0.0
    %538 = vmatpush1.msra.mxu0 0.0
    %539 = vmatprep.subr.mxu0 0.0
    %540 = vmatpush1.msra.mxu0 0.0
    %541 = vmatprep.subr.mxu0 0.0
    %542 = vmatpush1.msra.mxu0 0.0
    %543 = vmatprep.subr.mxu0 0.0
    %544 = vmatpush1.msra.mxu0 0.0
    %545 = vmatprep.subr.mxu0 0.0
    %546 = vmatpush1.msra.mxu0 0.0
    %547 = vmatprep.subr.mxu0 0.0
    %548 = vmatpush1.msra.mxu0 0.0
    %549 = vmatprep.subr.mxu0 0.0
    %550 = vmatpush1.msra.mxu0 0.0
    %551 = vmatprep.subr.mxu0 0.0
    %552 = vmatpush1.msra.mxu0 0.0
    %553 = vmatprep.subr.mxu0 0.0
    %554 = vmatpush1.msra.mxu0 0.0
    %555 = vmatprep.subr.mxu0 0.0
    %556 = vmatpush1.msra.mxu0 0.0
    %557 = vmatprep.subr.mxu0 0.0
    %558 = vmatpush1.msra.mxu0 0.0
    %559 = vmatprep.subr.mxu0 0.0
    %560 = vmatpush1.msra.mxu0 0.0
    %561 = vmatprep.subr.mxu0 0.0
    %562 = vmatpush1.msra.mxu0 0.0
    %563 = vmatprep.subr.mxu0 0.0
    %564 = vmatpush1.msra.mxu0 0.0
    %565 = vmatprep.mubr.f32.mxu0 0.0
    %566 = vmatmul.mubr.f32.gmra.mrb[0].mxu0 %v499
    %v567 = vpop.f32.mrb[0].mxu0
    %v568 = vadd.f32 0.0, %v567
    %v569 = vpop.f32.mrb[0].mxu0
    %570 = vdwg.mxu0
    %v571 = vadd.f32 %v395, %v568
    %v572 = vxor.u32 %v571, 2147483648
    %v573 = vmul.f32 %v572, 1.442695
    %v574 = vpow.pop %v573
    %v575 = vadd.f32 %v574, 1.0
    %v576 = vrcp.pop %v575
    %v577 = vmul.f32 1.0, %v576
    %v578 = vld [vmem:[#allocation11] sm:$0xff]
    %v579 = vld [vmem:[#allocation11 + $0x8] sm:$0xff]
    %v580 = vld [vmem:[#allocation11 + $0x10] sm:$0xff]
    %v581 = vld [vmem:[#allocation11 + $0x18] sm:$0xff]
    %v582 = vld [vmem:[#allocation11 + $0x20] sm:$0xff]
    %v583 = vld [vmem:[#allocation11 + $0x28] sm:$0xff]
    %v584 = vld [vmem:[#allocation11 + $0x30] sm:$0xff]
    %v585 = vld [vmem:[#allocation11 + $0x38] sm:$0xff]
    %v586 = vld [vmem:[#allocation11 + $0x40] sm:$0xff]
    %v587 = vld [vmem:[#allocation11 + $0x48] sm:$0xff]
    %v588 = vld [vmem:[#allocation11 + $0x50] sm:$0xff]
    %v589 = vld [vmem:[#allocation11 + $0x58] sm:$0xff]
    %v590 = vld [vmem:[#allocation11 + $0x60] sm:$0xff]
    %v591 = vld [vmem:[#allocation11 + $0x68] sm:$0xff]
    %v592 = vld [vmem:[#allocation11 + $0x70] sm:$0xff]
    %v593 = vld [vmem:[#allocation11 + $0x78] sm:$0xff]
    %594 = vmatprep.subr.mxu0 0.0
    %595 = vmatpush1.msra.mxu0 %v578
    %596 = vmatprep.subr.mxu0 0.0
    %597 = vmatpush1.msra.mxu0 %v579
    %598 = vmatprep.subr.mxu0 0.0
    %599 = vmatpush1.msra.mxu0 %v580
    %600 = vmatprep.subr.mxu0 0.0
    %601 = vmatpush1.msra.mxu0 %v581
    %602 = vmatprep.subr.mxu0 0.0
    %603 = vmatpush1.msra.mxu0 %v582
    %604 = vmatprep.subr.mxu0 0.0
    %605 = vmatpush1.msra.mxu0 %v583
    %606 = vmatprep.subr.mxu0 0.0
    %607 = vmatpush1.msra.mxu0 %v584
    %608 = vmatprep.subr.mxu0 0.0
    %609 = vmatpush1.msra.mxu0 %v585
    %610 = vmatprep.subr.mxu0 0.0
    %611 = vmatpush1.msra.mxu0 %v586
    %612 = vmatprep.subr.mxu0 0.0
    %613 = vmatpush1.msra.mxu0 %v587
    %614 = vmatprep.subr.mxu0 0.0
    %615 = vmatpush1.msra.mxu0 %v588
    %616 = vmatprep.subr.mxu0 0.0
    %617 = vmatpush1.msra.mxu0 %v589
    %618 = vmatprep.subr.mxu0 0.0
    %619 = vmatpush1.msra.mxu0 %v590
    %620 = vmatprep.subr.mxu0 0.0
    %621 = vmatpush1.msra.mxu0 %v591
    %622 = vmatprep.subr.mxu0 0.0
    %623 = vmatpush1.msra.mxu0 %v592
    %624 = vmatprep.subr.mxu0 0.0
    %625 = vmatpush1.msra.mxu0 %v593
    %626 = vmatprep.subr.mxu0 0.0
    %627 = vmatpush1.msra.mxu0 0.0
    %628 = vmatprep.subr.mxu0 0.0
    %629 = vmatpush1.msra.mxu0 0.0
    %630 = vmatprep.subr.mxu0 0.0
    %631 = vmatpush1.msra.mxu0 0.0
    %632 = vmatprep.subr.mxu0 0.0
    %633 = vmatpush1.msra.mxu0 0.0
    %634 = vmatprep.subr.mxu0 0.0
    %635 = vmatpush1.msra.mxu0 0.0
    %636 = vmatprep.subr.mxu0 0.0
    %637 = vmatpush1.msra.mxu0 0.0
    %638 = vmatprep.subr.mxu0 0.0
    %639 = vmatpush1.msra.mxu0 0.0
    %640 = vmatprep.subr.mxu0 0.0
    %641 = vmatpush1.msra.mxu0 0.0
    %642 = vmatprep.subr.mxu0 0.0
    %643 = vmatpush1.msra.mxu0 0.0
    %644 = vmatprep.subr.mxu0 0.0
    %645 = vmatpush1.msra.mxu0 0.0
    %646 = vmatprep.subr.mxu0 0.0
    %647 = vmatpush1.msra.mxu0 0.0
    %648 = vmatprep.subr.mxu0 0.0
    %649 = vmatpush1.msra.mxu0 0.0
    %650 = vmatprep.subr.mxu0 0.0
    %651 = vmatpush1.msra.mxu0 0.0
    %652 = vmatprep.subr.mxu0 0.0
    %653 = vmatpush1.msra.mxu0 0.0
    %654 = vmatprep.subr.mxu0 0.0
    %655 = vmatpush1.msra.mxu0 0.0
    %656 = vmatprep.subr.mxu0 0.0
    %657 = vmatpush1.msra.mxu0 0.0
    %658 = vmatprep.mubr.f32.mxu0 0.0
    %659 = vmatmul.mubr.f32.gmra.mrb[0].mxu0 %v127
    %v660 = vpop.f32.mrb[0].mxu0
    %v661 = vadd.f32 0.0, %v660
    %v662 = vpop.f32.mrb[0].mxu0
    %663 = vmatprep.mubr.f32.mxu0 0.0
    %664 = vmatmul.mubr.f32.gmra.mrb[0].mxu0 %v128
    %v665 = vpop.f32.mrb[0].mxu0
    %v666 = vadd.f32 0.0, %v665
    %v667 = vpop.f32.mrb[0].mxu0
    %668 = vmatprep.mubr.f32.mxu0 0.0
    %669 = vmatmul.mubr.f32.gmra.mrb[0].mxu0 %v129
    %v670 = vpop.f32.mrb[0].mxu0
    %v671 = vadd.f32 0.0, %v670
    %v672 = vpop.f32.mrb[0].mxu0
    %673 = vmatprep.mubr.f32.mxu0 0.0
    %674 = vmatmul.mubr.f32.gmra.mrb[0].mxu0 %v130
    %v675 = vpop.f32.mrb[0].mxu0
    %v676 = vadd.f32 0.0, %v675
    %v677 = vpop.f32.mrb[0].mxu0
    %678 = vmatprep.mubr.f32.mxu0 0.0
    %679 = vmatmul.mubr.f32.gmra.mrb[0].mxu0 %v131
    %v680 = vpop.f32.mrb[0].mxu0
    %v681 = vadd.f32 0.0, %v680
    %v682 = vpop.f32.mrb[0].mxu0
    %683 = vmatprep.mubr.f32.mxu0 0.0
    %684 = vmatmul.mubr.f32.gmra.mrb[0].mxu0 %v132
    %v685 = vpop.f32.mrb[0].mxu0
    %v686 = vadd.f32 0.0, %v685
    %v687 = vpop.f32.mrb[0].mxu0
    %688 = vmatprep.mubr.f32.mxu0 0.0
    %689 = vmatmul.mubr.f32.gmra.mrb[0].mxu0 %v133
    %v690 = vpop.f32.mrb[0].mxu0
    %v691 = vadd.f32 0.0, %v690
    %v692 = vpop.f32.mrb[0].mxu0
    %693 = vmatprep.mubr.f32.mxu0 0.0
    %694 = vmatmul.mubr.f32.gmra.mrb[0].mxu0 %v134
    %v695 = vpop.f32.mrb[0].mxu0
    %v696 = vadd.f32 0.0, %v695
    %v697 = vpop.f32.mrb[0].mxu0
    %698 = vdwg.mxu0
    %v700 = vcombine.high %v397, %v397
    %v702 = vunpack.c.l.s4 1966171168
    %v703 = vunpack.c.0.s8 %v702
    %v704 = vlaneseq
    %v705 = vshrl.u32 %v704, 7
    %v706 = vsub.s32 %v703, %v705
    %v707 = vrot.slane %v397, %v706
    %v709 = vunpack.c.l.s4 1966171168
    %v710 = vunpack.c.0.s8 %v709
    %v711 = vlaneseq
    %v712 = vshrl.u32 %v711, 7
    %v713 = vsub.s32 %v710, %v712
    %v714 = vrot.slane %v700, %v713
    %v715 = vcombine.high %v707, %v707
    %v716 = vcombine.high %v714, %v714
    %v718 = vunpack.c.l.s4 1966171168
    %v719 = vunpack.c.0.s8 %v718
    %v720 = vlaneseq
    %v721 = vshrl.u32 %v720, 7
    %v722 = vsub.s32 %v719, %v721
    %v723 = vrot.slane %v707, %v722
    %v725 = vunpack.c.l.s4 1966171168
    %v726 = vunpack.c.0.s8 %v725
    %v727 = vlaneseq
    %v728 = vshrl.u32 %v727, 7
    %v729 = vsub.s32 %v726, %v728
    %v730 = vrot.slane %v714, %v729
    %v732 = vunpack.c.l.s4 1966171168
    %v733 = vunpack.c.0.s8 %v732
    %v734 = vlaneseq
    %v735 = vshrl.u32 %v734, 7
    %v736 = vsub.s32 %v733, %v735
    %v737 = vrot.slane %v715, %v736
    %v739 = vunpack.c.l.s4 1966171168
    %v740 = vunpack.c.0.s8 %v739
    %v741 = vlaneseq
    %v742 = vshrl.u32 %v741, 7
    %v743 = vsub.s32 %v740, %v742
    %v744 = vrot.slane %v716, %v743
    %v745 = vcombine.high %v723, %v723
    %v746 = vcombine.high %v730, %v730
    %v747 = vcombine.high %v737, %v737
    %v748 = vcombine.high %v744, %v744
    %v749 = vlaneseq
    %v750 = vshrl.u32 %v749, 7
    %v751 = vsub.s32 0, %v750
    %v752 = vrot.slane %v723, %v751
    %v753 = vlaneseq
    %v754 = vshrl.u32 %v753, 7
    %v755 = vsub.s32 0, %v754
    %v756 = vrot.slane %v737, %v755
    %v757 = vlaneseq
    %v758 = vshrl.u32 %v757, 7
    %v759 = vsub.s32 0, %v758
    %v760 = vrot.slane %v745, %v759
    %v761 = vlaneseq
    %v762 = vshrl.u32 %v761, 7
    %v763 = vsub.s32 0, %v762
    %v764 = vrot.slane %v747, %v763
    %v765 = vlaneseq
    %v766 = vshrl.u32 %v765, 7
    %v767 = vsub.s32 0, %v766
    %v768 = vrot.slane %v730, %v767
    %v769 = vlaneseq
    %v770 = vshrl.u32 %v769, 7
    %v771 = vsub.s32 0, %v770
    %v772 = vrot.slane %v744, %v771
    %v773 = vlaneseq
    %v774 = vshrl.u32 %v773, 7
    %v775 = vsub.s32 0, %v774
    %v776 = vrot.slane %v746, %v775
    %v777 = vlaneseq
    %v778 = vshrl.u32 %v777, 7
    %v779 = vsub.s32 0, %v778
    %v780 = vrot.slane %v748, %v779
    %v789 = vadd.f32 %v661, %v752
    %v790 = vadd.f32 %v666, %v756
    %v791 = vadd.f32 %v671, %v760
    %v792 = vadd.f32 %v676, %v764
    %v793 = vadd.f32 %v681, %v768
    %v794 = vadd.f32 %v686, %v772
    %v795 = vadd.f32 %v691, %v776
    %v796 = vadd.f32 %v696, %v780
    %v797 = vxor.u32 %v789, 2147483648
    %v798 = vxor.u32 %v790, 2147483648
    %v799 = vxor.u32 %v791, 2147483648
    %v800 = vxor.u32 %v792, 2147483648
    %v801 = vxor.u32 %v793, 2147483648
    %v802 = vxor.u32 %v794, 2147483648
    %v803 = vxor.u32 %v795, 2147483648
    %v804 = vxor.u32 %v796, 2147483648
    %v805 = vmul.f32 %v797, 1.442695
    %v806 = vpow.pop %v805
    %v807 = vmul.f32 %v798, 1.442695
    %v808 = vpow.pop %v807
    %v809 = vmul.f32 %v799, 1.442695
    %v810 = vpow.pop %v809
    %v811 = vmul.f32 %v800, 1.442695
    %v812 = vpow.pop %v811
    %v813 = vmul.f32 %v801, 1.442695
    %v814 = vpow.pop %v813
    %v815 = vmul.f32 %v802, 1.442695
    %v816 = vpow.pop %v815
    %v817 = vmul.f32 %v803, 1.442695
    %v818 = vpow.pop %v817
    %v819 = vmul.f32 %v804, 1.442695
    %v820 = vpow.pop %v819
    %v821 = vadd.f32 %v806, 1.0
    %v822 = vadd.f32 %v808, 1.0
    %v823 = vadd.f32 %v810, 1.0
    %v824 = vadd.f32 %v812, 1.0
    %v825 = vadd.f32 %v814, 1.0
    %v826 = vadd.f32 %v816, 1.0
    %v827 = vadd.f32 %v818, 1.0
    %v828 = vadd.f32 %v820, 1.0
    %v829 = vrcp.pop %v821
    %v830 = vmul.f32 1.0, %v829
    %v831 = vrcp.pop %v822
    %v832 = vmul.f32 1.0, %v831
    %v833 = vrcp.pop %v823
    %v834 = vmul.f32 1.0, %v833
    %v835 = vrcp.pop %v824
    %v836 = vmul.f32 1.0, %v835
    %v837 = vrcp.pop %v825
    %v838 = vmul.f32 1.0, %v837
    %v839 = vrcp.pop %v826
    %v840 = vmul.f32 1.0, %v839
    %v841 = vrcp.pop %v827
    %v842 = vmul.f32 1.0, %v841
    %v843 = vrcp.pop %v828
    %v844 = vmul.f32 1.0, %v843
    %v845 = vmul.f32 %v830, %v127
    %v846 = vmul.f32 %v832, %v128
    %v847 = vmul.f32 %v834, %v129
    %v848 = vmul.f32 %v836, %v130
    %v849 = vmul.f32 %v838, %v131
    %v850 = vmul.f32 %v840, %v132
    %v851 = vmul.f32 %v842, %v133
    %v852 = vmul.f32 %v844, %v134
    %v853 = vrot.slane %v845, 4
    %v854 = vadd.f32 %v845, %v853
    %v855 = vrot.slane %v854, 2
    %v856 = vadd.f32 %v854, %v855
    %v857 = vrot.slane %v856, 1
    %v858 = vadd.f32 %v856, %v857
    %v859 = vrot.slane %v846, 4
    %v860 = vadd.f32 %v846, %v859
    %v861 = vrot.slane %v860, 2
    %v862 = vadd.f32 %v860, %v861
    %v863 = vrot.slane %v862, 1
    %v864 = vadd.f32 %v862, %v863
    %v865 = vrot.slane %v847, 4
    %v866 = vadd.f32 %v847, %v865
    %v867 = vrot.slane %v866, 2
    %v868 = vadd.f32 %v866, %v867
    %v869 = vrot.slane %v868, 1
    %v870 = vadd.f32 %v868, %v869
    %v871 = vrot.slane %v848, 4
    %v872 = vadd.f32 %v848, %v871
    %v873 = vrot.slane %v872, 2
    %v874 = vadd.f32 %v872, %v873
    %v875 = vrot.slane %v874, 1
    %v876 = vadd.f32 %v874, %v875
    %v877 = vrot.slane %v849, 4
    %v878 = vadd.f32 %v849, %v877
    %v879 = vrot.slane %v878, 2
    %v880 = vadd.f32 %v878, %v879
    %v881 = vrot.slane %v880, 1
    %v882 = vadd.f32 %v880, %v881
    %v883 = vrot.slane %v850, 4
    %v884 = vadd.f32 %v850, %v883
    %v885 = vrot.slane %v884, 2
    %v886 = vadd.f32 %v884, %v885
    %v887 = vrot.slane %v886, 1
    %v888 = vadd.f32 %v886, %v887
    %v889 = vrot.slane %v851, 4
    %v890 = vadd.f32 %v851, %v889
    %v891 = vrot.slane %v890, 2
    %v892 = vadd.f32 %v890, %v891
    %v893 = vrot.slane %v892, 1
    %v894 = vadd.f32 %v892, %v893
    %v895 = vrot.slane %v852, 4
    %v896 = vadd.f32 %v852, %v895
    %v897 = vrot.slane %v896, 2
    %v898 = vadd.f32 %v896, %v897
    %v899 = vrot.slane %v898, 1
    %v900 = vadd.f32 %v898, %v899
    %v901 = vld [vmem:[#allocation13] sm:$0xff]
    %v902 = vld [vmem:[#allocation13 + $0x8] sm:$0xff]
    %v903 = vld [vmem:[#allocation13 + $0x10] sm:$0xff]
    %v904 = vld [vmem:[#allocation13 + $0x18] sm:$0xff]
    %v905 = vld [vmem:[#allocation13 + $0x20] sm:$0xff]
    %v906 = vld [vmem:[#allocation13 + $0x28] sm:$0xff]
    %v907 = vld [vmem:[#allocation13 + $0x30] sm:$0xff]
    %v908 = vld [vmem:[#allocation13 + $0x38] sm:$0xff]
    %v909 = vld [vmem:[#allocation13 + $0x40] sm:$0xff]
    %v910 = vld [vmem:[#allocation13 + $0x48] sm:$0xff]
    %v911 = vld [vmem:[#allocation13 + $0x50] sm:$0xff]
    %v912 = vld [vmem:[#allocation13 + $0x58] sm:$0xff]
    %v913 = vld [vmem:[#allocation13 + $0x60] sm:$0xff]
    %v914 = vld [vmem:[#allocation13 + $0x68] sm:$0xff]
    %v915 = vld [vmem:[#allocation13 + $0x70] sm:$0xff]
    %v916 = vld [vmem:[#allocation13 + $0x78] sm:$0xff]
    %v925 = vsel %vm247, %v864, %v858
    %v926 = vsel %vm249, %v870, %v925
    %v927 = vsel %vm251, %v876, %v926
    %v928 = vsel %vm253, %v882, %v927
    %v929 = vsel %vm255, %v888, %v928
    %v930 = vsel %vm257, %v894, %v929
    %v931 = vsel %vm259, %v900, %v930
    %933 = vmatprep.subr.mxu0 0.0
    %934 = vmatpush1.msra.mxu0 %v901
    %935 = vmatprep.subr.mxu0 0.0
    %936 = vmatpush1.msra.mxu0 %v902
    %937 = vmatprep.subr.mxu0 0.0
    %938 = vmatpush1.msra.mxu0 %v903
    %939 = vmatprep.subr.mxu0 0.0
    %940 = vmatpush1.msra.mxu0 %v904
    %941 = vmatprep.subr.mxu0 0.0
    %942 = vmatpush1.msra.mxu0 %v905
    %943 = vmatprep.subr.mxu0 0.0
    %944 = vmatpush1.msra.mxu0 %v906
    %945 = vmatprep.subr.mxu0 0.0
    %946 = vmatpush1.msra.mxu0 %v907
    %947 = vmatprep.subr.mxu0 0.0
    %948 = vmatpush1.msra.mxu0 %v908
    %949 = vmatprep.subr.mxu0 0.0
    %950 = vmatpush1.msra.mxu0 %v909
    %951 = vmatprep.subr.mxu0 0.0
    %952 = vmatpush1.msra.mxu0 %v910
    %953 = vmatprep.subr.mxu0 0.0
    %954 = vmatpush1.msra.mxu0 %v911
    %955 = vmatprep.subr.mxu0 0.0
    %956 = vmatpush1.msra.mxu0 %v912
    %957 = vmatprep.subr.mxu0 0.0
    %958 = vmatpush1.msra.mxu0 %v913
    %959 = vmatprep.subr.mxu0 0.0
    %960 = vmatpush1.msra.mxu0 %v914
    %961 = vmatprep.subr.mxu0 0.0
    %962 = vmatpush1.msra.mxu0 %v915
    %963 = vmatprep.subr.mxu0 0.0
    %964 = vmatpush1.msra.mxu0 %v916
    %965 = vmatprep.subr.mxu0 0.0
    %966 = vmatpush1.msra.mxu0 0.0
    %967 = vmatprep.subr.mxu0 0.0
    %968 = vmatpush1.msra.mxu0 0.0
    %969 = vmatprep.subr.mxu0 0.0
    %970 = vmatpush1.msra.mxu0 0.0
    %971 = vmatprep.subr.mxu0 0.0
    %972 = vmatpush1.msra.mxu0 0.0
    %973 = vmatprep.subr.mxu0 0.0
    %974 = vmatpush1.msra.mxu0 0.0
    %975 = vmatprep.subr.mxu0 0.0
    %976 = vmatpush1.msra.mxu0 0.0
    %977 = vmatprep.subr.mxu0 0.0
    %978 = vmatpush1.msra.mxu0 0.0
    %979 = vmatprep.subr.mxu0 0.0
    %980 = vmatpush1.msra.mxu0 0.0
    %981 = vmatprep.subr.mxu0 0.0
    %982 = vmatpush1.msra.mxu0 0.0
    %983 = vmatprep.subr.mxu0 0.0
    %984 = vmatpush1.msra.mxu0 0.0
    %985 = vmatprep.subr.mxu0 0.0
    %986 = vmatpush1.msra.mxu0 0.0
    %987 = vmatprep.subr.mxu0 0.0
    %988 = vmatpush1.msra.mxu0 0.0
    %989 = vmatprep.subr.mxu0 0.0
    %990 = vmatpush1.msra.mxu0 0.0
    %991 = vmatprep.subr.mxu0 0.0
    %992 = vmatpush1.msra.mxu0 0.0
    %993 = vmatprep.subr.mxu0 0.0
    %994 = vmatpush1.msra.mxu0 0.0
    %995 = vmatprep.subr.mxu0 0.0
    %996 = vmatpush1.msra.mxu0 0.0
    %997 = vmatprep.mubr.f32.mxu0 0.0
    %998 = vmatmul.mubr.f32.gmra.mrb[0].mxu0 %v931
    %v999 = vpop.f32.mrb[0].mxu0
    %v1000 = vadd.f32 0.0, %v999
    %v1001 = vpop.f32.mrb[0].mxu0
    %1002 = vdwg.mxu0
    %v1003 = vadd.f32 %v466, %v1000
    %v1004 = vtanh.pop %v1003
    %v1005 = vsub.f32 1.0, %v577
    %v1006 = vmul.f32 %v1005, %v499
    %v1007 = vmul.f32 %v577, %v1004
    %v1008 = vadd.f32 %v1006, %v1007
    %1009 = vst [vmem:[#allocation14] sm:$0xff] %v1008
    // Predicated region
    $region62: #{gru_step.1} parent=1 // pred_check
      _
    $region63: #{gru_step.1} parent=1 // pred_check_branch
      %1011 = sbr.rel (0) target = $region65
    $region64: #{gru_step.1} parent=1 // pred_region
      %s1013 = ssub.s32 128, 128
      %1014 = vsyncadd [#allocation4], %s1013
      %s1016 = sshll.u32 [#allocation14], 4
      %s1017 = int_to_ptr.vmem [resolvable:$true] %s1016
      %1019 = dma.vmem_to_hbm [thread:$0]  %s1017, 128, %s8, [#allocation4]
    $region65: #{gru_step.1} parent=1 // pred_fallthru
      _
    // Predicated region
    $region66: #{gru_step.1} parent=1 // pred_check
      _
    $region67: #{gru_step.1} parent=1 // pred_check_branch
      %1021 = sbr.rel (0) target = $region69
    $region68: #{gru_step.1} parent=1 // pred_region
      %s1023 = ssub.s32 128, 128
      %1024 = vsyncadd [#allocation16], %s1023
      %s1026 = sshll.u32 [#allocation15], 4
      %s1027 = int_to_ptr.vmem [resolvable:$true] %s1026
      %1029 = dma.vmem_to_hbm [thread:$0]  %s1027, 128, %s9, [#allocation16]
    $region69: #{gru_step.1} parent=1 // pred_fallthru
      _
    // Predicated region
    $region70: #{gru_step.1} parent=1 // pred_check
      _
    $region71: #{gru_step.1} parent=1 // pred_check_branch
      %1031 = sbr.rel (0) target = $region73
    $region72: #{gru_step.1} parent=1 // pred_region
      %1032 = dma.done [#allocation4], 128
    $region73: #{gru_step.1} parent=1 // pred_fallthru
      _
    // Predicated region
    $region74: #{gru_step.1} parent=1 // pred_check
      _
    $region75: #{gru_step.1} parent=1 // pred_check_branch
      %1034 = sbr.rel (0) target = $region77
    $region76: #{gru_step.1} parent=1 // pred_region
      %1035 = dma.done [#allocation16], 128
    $region77: #{gru_step.1} parent=1 // pred_fallthru
      _
    %1036 = vsyncpa [#allocation3], 1
    %1037 = vsyncpa [#allocation6], 1
    %1038 = vsyncpa [#allocation9], 1
    %1039 = vsyncpa [#allocation12], 1
    %1040 = vsyncpa [#allocation4], 1
    %1041 = vsyncpa [#allocation16], 1

</llo_original>
